<compile_context>
chip_gen: v7x
topology: tpu7x:2x2x1
jax: 0.10.0
libtpu: 0.0.40
codegen_flags: <defaults>
</compile_context>

<pallas_src>
import jax
import jax.numpy as jnp
from jax.experimental import pallas as pl
from jax.experimental.pallas import tpu as pltpu

hidden_size_a = 12
hidden_size_b = 6
input_size = 24
num_classes = 2

_BLOCK_ROWS = 1024  # batch tile cap (multiple of 8); per-step VMEM stays far under limits


def _round_up(n, m):
    return ((n + m - 1) // m) * m


def _pack_params(w1, b1, w2, b2, w3, b3):
    """Pack all 6 weight/bias tensors into a single (45, hidden_size_a) f32 buffer."""
    def pad_cols(a):
        return jnp.pad(a, ((0, 0), (0, hidden_size_a - a.shape[1])))

    return jnp.concatenate(
        [
            w1.astype(jnp.float32),            # rows  0:24, cols 0:12
            b1.astype(jnp.float32),            # row  24,    cols 0:12
            pad_cols(w2.astype(jnp.float32)),  # rows 25:37, cols 0:6
            pad_cols(b2.astype(jnp.float32)),  # row  37,    cols 0:6
            pad_cols(w3.astype(jnp.float32)),  # rows 38:44, cols 0:2
            pad_cols(b3.astype(jnp.float32)),  # row  44,    cols 0:2
        ],
        axis=0,
    )


def mlp_softmax_kernel(x_ref, p_ref, o_ref):
    # Unpack the VMEM-resident parameter slab (static slices; tiny).
    p = p_ref[...]
    w1 = p[0:input_size, :hidden_size_a]                                  # (24, 12)
    b1 = p[input_size:input_size + 1, :hidden_size_a]                     # (1, 12)
    r2 = input_size + 1
    w2 = p[r2:r2 + hidden_size_a, :hidden_size_b]                         # (12, 6)
    b2 = p[r2 + hidden_size_a:r2 + hidden_size_a + 1, :hidden_size_b]     # (1, 6)
    r3 = r2 + hidden_size_a + 1
    w3 = p[r3:r3 + hidden_size_b, :num_classes]                           # (6, 2)
    b3 = p[r3 + hidden_size_b:r3 + hidden_size_b + 1, :num_classes]       # (1, 2)

    x = x_ref[...]  # (TB, 24) f32

    h_a = jnp.dot(x, w1, preferred_element_type=jnp.float32) + b1
    h_a = jnp.maximum(h_a, 0.0)
    h_b = jnp.dot(h_a, w2, preferred_element_type=jnp.float32) + b2
    h_b = jnp.maximum(h_b, 0.0)
    logits = jnp.dot(h_b, w3, preferred_element_type=jnp.float32) + b3    # (TB, 2)

    # Numerically stable softmax over the class axis (mirrors nn.Softmax(dim=1)).
    m = jnp.max(logits, axis=1, keepdims=True)
    e = jnp.exp(logits - m)
    probs = e / jnp.sum(e, axis=1, keepdims=True)
    o_ref[...] = probs.astype(o_ref.dtype)


@jax.jit
def simple_feed_forward(x, w1, b1, w2, b2, w3, b3):
    """x: (B, input_size) f32. Returns softmax probabilities (B, num_classes) f32."""
    B = x.shape[0]
    TB = min(_BLOCK_ROWS, _round_up(B, 8))
    B_pad = _round_up(B, TB)

    x_in = x.astype(jnp.float32)
    if B_pad != B:
        # Zero-padded rows produce finite logits (just the biases) -> no NaNs; sliced off below.
        x_in = jnp.pad(x_in, ((0, B_pad - B), (0, 0)))

    params = _pack_params(w1, b1, w2, b2, w3, b3)

    out = pl.pallas_call(
        mlp_softmax_kernel,
        out_shape=jax.ShapeDtypeStruct((B_pad, num_classes), jnp.float32),
        grid=(B_pad // TB,),
        in_specs=[
            # batch-tiled activations (software-pipelined across grid steps)
            pl.BlockSpec((TB, input_size), lambda i: (i, 0)),
            # packed weights: full array, constant block index -> VMEM-resident once
            pl.BlockSpec(params.shape, lambda i: (0, 0)),
        ],
        out_specs=pl.BlockSpec((TB, num_classes), lambda i: (i, 0)),
        compiler_params=pltpu.CompilerParams(
            dimension_semantics=("parallel",),  # shards batch grid across TCs on v7x
        ),
    )(x_in, params)
    return out[:B]


def _init_linear(key, fan_in, fan_out):
    """PyTorch-style Linear init: U(-1/sqrt(fan_in), 1/sqrt(fan_in)).
    Weight laid out (fan_in, fan_out) so the kernel computes y = x @ W + b."""
    kw, kb = jax.random.split(key)
    bound = 1.0 / jnp.sqrt(jnp.float32(fan_in))
    w = jax.random.uniform(kw, (fan_in, fan_out), jnp.float32, -bound, bound)
    b = jax.random.uniform(kb, (1, fan_out), jnp.float32, -bound, bound)
    return w, b


def _reference(x, w1, b1, w2, b2, w3, b3):
    ha = jnp.maximum(x @ w1 + b1, 0.0)
    hb = jnp.maximum(ha @ w2 + b2, 0.0)
    return jax.nn.softmax(hb @ w3 + b3, axis=1)


if __name__ == "__main__":
    key = jax.random.PRNGKey(0)
    kx, k1, k2, k3, kx2 = jax.random.split(key, 5)

    w1, b1 = _init_linear(k1, input_size, hidden_size_a)
    w2, b2 = _init_linear(k2, hidden_size_a, hidden_size_b)
    w3, b3 = _init_linear(k3, hidden_size_b, num_classes)

    # Small example batch.
    batch = 8
    x = jax.random.normal(kx, (batch, input_size), jnp.float32)
    out = jax.block_until_ready(simple_feed_forward(x, w1, b1, w2, b2, w3, b3))

    ref = _reference(x, w1, b1, w2, b2, w3, b3)
    assert out.shape == (batch, num_classes)
    assert jnp.allclose(out, ref, atol=1e-5, rtol=1e-5)
    assert jnp.allclose(jnp.sum(out, axis=1), 1.0, atol=1e-5)

    # Exercise the multi-tile grid + batch-padding path.
    batch2 = 2500
    x2 = jax.random.normal(kx2, (batch2, input_size), jnp.float32)
    out2 = jax.block_until_ready(simple_feed_forward(x2, w1, b1, w2, b2, w3, b3))
    ref2 = _reference(x2, w1, b1, w2, b2, w3, b3)
    assert out2.shape == (batch2, num_classes)
    assert jnp.allclose(out2, ref2, atol=1e-5, rtol=1e-5)
    assert jnp.allclose(jnp.sum(out2, axis=1), 1.0, atol=1e-5)

    print("KERNEL_OK")
</pallas_src>

<mosaic_0001>
module attributes {stable_mosaic.version = 11 : i64} {
  func.func @mlp_softmax_kernel(%arg0: i32, %arg1: memref<8x24xf32, #tpu.memory_space<vmem>>, %arg2: memref<45x12xf32, #tpu.memory_space<vmem>>, %arg3: memref<8x2xf32, #tpu.memory_space<vmem>>) attributes {dimension_semantics = [#tpu.dimension_semantics<parallel>], iteration_bounds = array<i64: 1>, scalar_prefetch = 0 : i64, scratch_operands = 0 : i64, tpu.core_type = #tpu.core_type<tc>, window_params = [{transform_indices = @transform_0, window_bounds = array<i64: 8, 24>}, {pipeline_mode = #tpu.pipeline_mode<synchronous>, transform_indices = @transform_1, window_bounds = array<i64: 45, 12>}, {transform_indices = @transform_2, window_bounds = array<i64: 8, 2>}]} {
    %c0 = arith.constant 0 : index
    %c0_0 = arith.constant 0 : index
    %0 = vector.load %arg2[%c0, %c0_0] : memref<45x12xf32, #tpu.memory_space<vmem>>, vector<45x12xf32>
    %1 = vector.extract_strided_slice %0 {offsets = [0, 0], sizes = [24, 12], strides = [1, 1]} : vector<45x12xf32> to vector<24x12xf32>
    %2 = vector.extract_strided_slice %0 {offsets = [24, 0], sizes = [1, 12], strides = [1, 1]} : vector<45x12xf32> to vector<1x12xf32>
    %3 = vector.extract_strided_slice %0 {offsets = [25, 0], sizes = [12, 6], strides = [1, 1]} : vector<45x12xf32> to vector<12x6xf32>
    %4 = vector.extract_strided_slice %0 {offsets = [37, 0], sizes = [1, 6], strides = [1, 1]} : vector<45x12xf32> to vector<1x6xf32>
    %5 = vector.extract_strided_slice %0 {offsets = [38, 0], sizes = [6, 2], strides = [1, 1]} : vector<45x12xf32> to vector<6x2xf32>
    %6 = vector.extract_strided_slice %0 {offsets = [44, 0], sizes = [1, 2], strides = [1, 1]} : vector<45x12xf32> to vector<1x2xf32>
    %c0_1 = arith.constant 0 : index
    %c0_2 = arith.constant 0 : index
    %7 = vector.load %arg1[%c0_1, %c0_2] : memref<8x24xf32, #tpu.memory_space<vmem>>, vector<8x24xf32>
    %cst = arith.constant dense<0.000000e+00> : vector<8x12xf32>
    %8 = tpu.matmul %7, %1, %cst {dimension_numbers = #tpu.dot_dimension_numbers<[1], [0], [0], [1], [0, 0, 1, 1], [], []>} : vector<8x24xf32>, vector<24x12xf32>, vector<8x12xf32> -> vector<8x12xf32>
    %9 = vector.broadcast %2 : vector<1x12xf32> to vector<8x12xf32>
    %10 = arith.addf %8, %9 : vector<8x12xf32>
    %cst_3 = arith.constant 0.000000e+00 : f32
    %11 = vector.broadcast %cst_3 : f32 to vector<8x12xf32>
    %12 = arith.maximumf %10, %11 : vector<8x12xf32>
    %cst_4 = arith.constant dense<0.000000e+00> : vector<8x6xf32>
    %13 = tpu.matmul %12, %3, %cst_4 {dimension_numbers = #tpu.dot_dimension_numbers<[1], [0], [0], [1], [0, 0, 1, 1], [], []>} : vector<8x12xf32>, vector<12x6xf32>, vector<8x6xf32> -> vector<8x6xf32>
    %14 = vector.broadcast %4 : vector<1x6xf32> to vector<8x6xf32>
    %15 = arith.addf %13, %14 : vector<8x6xf32>
    %cst_5 = arith.constant 0.000000e+00 : f32
    %16 = vector.broadcast %cst_5 : f32 to vector<8x6xf32>
    %17 = arith.maximumf %15, %16 : vector<8x6xf32>
    %cst_6 = arith.constant dense<0.000000e+00> : vector<8x2xf32>
    %18 = tpu.matmul %17, %5, %cst_6 {dimension_numbers = #tpu.dot_dimension_numbers<[1], [0], [0], [1], [0, 0, 1, 1], [], []>} : vector<8x6xf32>, vector<6x2xf32>, vector<8x2xf32> -> vector<8x2xf32>
    %19 = vector.broadcast %6 : vector<1x2xf32> to vector<8x2xf32>
    %20 = arith.addf %18, %19 : vector<8x2xf32>
    %cst_7 = arith.constant dense<0xFF800000> : vector<8xf32>
    %21 = vector.multi_reduction <maximumf>, %20, %cst_7 [1] : vector<8x2xf32> to vector<8xf32>
    %22 = vector.shape_cast %21 : vector<8xf32> to vector<8x1xf32>
    %23 = vector.broadcast %22 : vector<8x1xf32> to vector<8x2xf32>
    %24 = arith.subf %20, %23 : vector<8x2xf32>
    %25 = math.exp %24 : vector<8x2xf32>
    %cst_8 = arith.constant dense<0.000000e+00> : vector<8xf32>
    %26 = vector.multi_reduction <add>, %25, %cst_8 [1] : vector<8x2xf32> to vector<8xf32>
    %27 = vector.shape_cast %26 : vector<8xf32> to vector<8x1xf32>
    %28 = vector.broadcast %27 : vector<8x1xf32> to vector<8x2xf32>
    %29 = arith.divf %25, %28 : vector<8x2xf32>
    %c0_9 = arith.constant 0 : index
    %c0_10 = arith.constant 0 : index
    %30 = vector.load %arg3[%c0_9, %c0_10] : memref<8x2xf32, #tpu.memory_space<vmem>>, vector<8x2xf32>
    tpu.vector_store %arg3[%c0_9, %c0_10], %29 {strides = array<i32>} : memref<8x2xf32, #tpu.memory_space<vmem>>, vector<8x2xf32>,
    return
  }
  func.func @transform_0(%arg0: i32) -> (i32, i32) {
    %c0_i32 = arith.constant 0 : i32
    %c0_i32_0 = arith.constant 0 : i32
    return %arg0, %c0_i32 : i32, i32
  }
  func.func @transform_1(%arg0: i32) -> (i32, i32) {
    %c0_i32 = arith.constant 0 : i32
    %c0_i32_0 = arith.constant 0 : i32
    %c0_i32_1 = arith.constant 0 : i32
    return %c0_i32, %c0_i32_0 : i32, i32
  }
  func.func @transform_2(%arg0: i32) -> (i32, i32) {
    %c0_i32 = arith.constant 0 : i32
    %c0_i32_0 = arith.constant 0 : i32
    return %arg0, %c0_i32 : i32, i32
  }
}

</mosaic_0001>

<llo_original>
// kernel: simple_feed_forward.1
$region0: #{simple_feed_forward.1}
  #allocation0 [shape = 'u32[]', space=smem, size = 0x4, offset = 0x4, fixed_abs, tag = 'smem constant byte address 0x4 - core index']
  #allocation1 [shape = 'u32[144,128]{1,0:T(1,128)}', space=vmem, size = 0x12000, scoped, tag = 'internal scratch']
  %s0 = inlined_call_operand.vmem [shape: f32[8,24], index: 0, kind: input, shape index: {}]
  %s1 = inlined_call_operand.vmem [shape: f32[45,12], index: 1, kind: input, shape index: {}]
  %s2 = inlined_call_operand.vmem [shape: f32[8,2], index: 2, kind: output, shape index: {}]
  %s3 = sld [smem:[#allocation0]]
  $region18: #{simple_feed_forward.1} parent=0
    _
  %s5 = ssub.s32 1, %s3
  %s6 = scalar_select 0, %s5, %s3
  // Predicated region
  $region2: #{simple_feed_forward.1} parent=0 // pred_check
    _
  $region3: #{simple_feed_forward.1} parent=0 // pred_check_branch
    %8 = sbr.rel (0) target = $region5
  $region4: #{simple_feed_forward.1} parent=0 // pred_region
    _
  $region5: #{simple_feed_forward.1} parent=0 // pred_fallthru
    _
  // Predicated region
  $region6: #{simple_feed_forward.1} parent=0 // pred_check
    _
  $region7: #{simple_feed_forward.1} parent=0 // pred_check_branch
    %10 = sbr.rel (0) target = $region9
  $region8: #{simple_feed_forward.1} parent=0 // pred_region
    _
  $region9: #{simple_feed_forward.1} parent=0 // pred_fallthru
    _
  %v11 = vld [vmem:[%s1] sm:$0xff]
  %v12 = vld [vmem:[%s1 + $0x8] sm:$0xff]
  %v13 = vld [vmem:[%s1 + $0x10] sm:$0xff]
  %v14 = vld [vmem:[%s1 + $0x18] sm:$0xff]
  %v15 = vld [vmem:[%s1 + $0x20] sm:$0xff]
  %v16 = vld [vmem:[%s1 + $0x28] sm:$0x1f]
  %v17 = vld [vmem:[%s0] sm:$0xff]
  %v18 = vlaneseq
  %v19 = vshrl.u32 %v18, 7
  %v20 = vsub.s32 0, %v19
  %v21 = vrot.slane %v14, %v20
  %vm22 = vcmask 195584
  %v24 = vsel %vm22, %v17, 0
  %26 = vmatprep.subr.mxu0 0.0
  %27 = vmatpush1.msra.mxu0 %v11
  %28 = vmatprep.subr.mxu0 0.0
  %29 = vmatpush1.msra.mxu0 %v12
  %30 = vmatprep.subr.mxu0 0.0
  %31 = vmatpush1.msra.mxu0 %v13
  %32 = vmatprep.subr.mxu0 0.0
  %33 = vmatpush1.msra.mxu0 0.0
  %34 = vmatprep.subr.mxu0 0.0
  %35 = vmatpush1.msra.mxu0 0.0
  %36 = vmatprep.subr.mxu0 0.0
  %37 = vmatpush1.msra.mxu0 0.0
  %38 = vmatprep.subr.mxu0 0.0
  %39 = vmatpush1.msra.mxu0 0.0
  %40 = vmatprep.subr.mxu0 0.0
  %41 = vmatpush1.msra.mxu0 0.0
  %42 = vmatprep.subr.mxu0 0.0
  %43 = vmatpush1.msra.mxu0 0.0
  %44 = vmatprep.subr.mxu0 0.0
  %45 = vmatpush1.msra.mxu0 0.0
  %46 = vmatprep.subr.mxu0 0.0
  %47 = vmatpush1.msra.mxu0 0.0
  %48 = vmatprep.subr.mxu0 0.0
  %49 = vmatpush1.msra.mxu0 0.0
  %50 = vmatprep.subr.mxu0 0.0
  %51 = vmatpush1.msra.mxu0 0.0
  %52 = vmatprep.subr.mxu0 0.0
  %53 = vmatpush1.msra.mxu0 0.0
  %54 = vmatprep.subr.mxu0 0.0
  %55 = vmatpush1.msra.mxu0 0.0
  %56 = vmatprep.subr.mxu0 0.0
  %57 = vmatpush1.msra.mxu0 0.0
  %58 = vmatprep.subr.mxu0 0.0
  %59 = vmatpush1.msra.mxu0 0.0
  %60 = vmatprep.subr.mxu0 0.0
  %61 = vmatpush1.msra.mxu0 0.0
  %62 = vmatprep.subr.mxu0 0.0
  %63 = vmatpush1.msra.mxu0 0.0
  %64 = vmatprep.subr.mxu0 0.0
  %65 = vmatpush1.msra.mxu0 0.0
  %66 = vmatprep.subr.mxu0 0.0
  %67 = vmatpush1.msra.mxu0 0.0
  %68 = vmatprep.subr.mxu0 0.0
  %69 = vmatpush1.msra.mxu0 0.0
  %70 = vmatprep.subr.mxu0 0.0
  %71 = vmatpush1.msra.mxu0 0.0
  %72 = vmatprep.subr.mxu0 0.0
  %73 = vmatpush1.msra.mxu0 0.0
  %74 = vmatprep.subr.mxu0 0.0
  %75 = vmatpush1.msra.mxu0 0.0
  %76 = vmatprep.subr.mxu0 0.0
  %77 = vmatpush1.msra.mxu0 0.0
  %78 = vmatprep.subr.mxu0 0.0
  %79 = vmatpush1.msra.mxu0 0.0
  %80 = vmatprep.subr.mxu0 0.0
  %81 = vmatpush1.msra.mxu0 0.0
  %82 = vmatprep.subr.mxu0 0.0
  %83 = vmatpush1.msra.mxu0 0.0
  %84 = vmatprep.subr.mxu0 0.0
  %85 = vmatpush1.msra.mxu0 0.0
  %86 = vmatprep.subr.mxu0 0.0
  %87 = vmatpush1.msra.mxu0 0.0
  %88 = vmatprep.subr.mxu0 0.0
  %89 = vmatpush1.msra.mxu0 0.0
  %90 = vmatprep.mubr.f32.mxu0 0.0
  %91 = vmatmul.mubr.f32.gmra.mrb[0].mxu0 %v24
  %v92 = vpop.f32.mrb[0].mxu0
  %v93 = vadd.f32 %v21, %v92
  %v94 = vpop.f32.mrb[0].mxu0
  %95 = vdwg.mxu0
  %v96 = vmax.f32 %v93, 0.0
  %v97 = vlaneseq
  %v98 = vshrl.u32 %v97, 7
  %v99 = vsub.s32 5, %v98
  %v100 = vrot.slane %v15, %v99
  %vm103 = vcmask 1046528
  %v104 = vrot.slane %v14, 1
  %v105 = vrot.slane %v15, 1
  %v106 = vsel %vm103, %v104, %v105
  %vm108 = vcmask 97280
  %v110 = vsel %vm108, %v96, 0
  %vm112 = vcmask 1043456
  %v113 = vsel %vm112, %v105, 0
  %115 = vmatprep.subr.mxu0 0.0
  %116 = vmatpush1.msra.mxu0 %v106
  %117 = vmatprep.subr.mxu0 0.0
  %118 = vmatpush1.msra.mxu0 %v113
  %119 = vmatprep.subr.mxu0 0.0
  %120 = vmatpush1.msra.mxu0 0.0
  %121 = vmatprep.subr.mxu0 0.0
  %122 = vmatpush1.msra.mxu0 0.0
  %123 = vmatprep.subr.mxu0 0.0
  %124 = vmatpush1.msra.mxu0 0.0
  %125 = vmatprep.subr.mxu0 0.0
  %126 = vmatpush1.msra.mxu0 0.0
  %127 = vmatprep.subr.mxu0 0.0
  %128 = vmatpush1.msra.mxu0 0.0
  %129 = vmatprep.subr.mxu0 0.0
  %130 = vmatpush1.msra.mxu0 0.0
  %131 = vmatprep.subr.mxu0 0.0
  %132 = vmatpush1.msra.mxu0 0.0
  %133 = vmatprep.subr.mxu0 0.0
  %134 = vmatpush1.msra.mxu0 0.0
  %135 = vmatprep.subr.mxu0 0.0
  %136 = vmatpush1.msra.mxu0 0.0
  %137 = vmatprep.subr.mxu0 0.0
  %138 = vmatpush1.msra.mxu0 0.0
  %139 = vmatprep.subr.mxu0 0.0
  %140 = vmatpush1.msra.mxu0 0.0
  %141 = vmatprep.subr.mxu0 0.0
  %142 = vmatpush1.msra.mxu0 0.0
  %143 = vmatprep.subr.mxu0 0.0
  %144 = vmatpush1.msra.mxu0 0.0
  %145 = vmatprep.subr.mxu0 0.0
  %146 = vmatpush1.msra.mxu0 0.0
  %147 = vmatprep.subr.mxu0 0.0
  %148 = vmatpush1.msra.mxu0 0.0
  %149 = vmatprep.subr.mxu0 0.0
  %150 = vmatpush1.msra.mxu0 0.0
  %151 = vmatprep.subr.mxu0 0.0
  %152 = vmatpush1.msra.mxu0 0.0
  %153 = vmatprep.subr.mxu0 0.0
  %154 = vmatpush1.msra.mxu0 0.0
  %155 = vmatprep.subr.mxu0 0.0
  %156 = vmatpush1.msra.mxu0 0.0
  %157 = vmatprep.subr.mxu0 0.0
  %158 = vmatpush1.msra.mxu0 0.0
  %159 = vmatprep.subr.mxu0 0.0
  %160 = vmatpush1.msra.mxu0 0.0
  %161 = vmatprep.subr.mxu0 0.0
  %162 = vmatpush1.msra.mxu0 0.0
  %163 = vmatprep.subr.mxu0 0.0
  %164 = vmatpush1.msra.mxu0 0.0
  %165 = vmatprep.subr.mxu0 0.0
  %166 = vmatpush1.msra.mxu0 0.0
  %167 = vmatprep.subr.mxu0 0.0
  %168 = vmatpush1.msra.mxu0 0.0
  %169 = vmatprep.subr.mxu0 0.0
  %170 = vmatpush1.msra.mxu0 0.0
  %171 = vmatprep.subr.mxu0 0.0
  %172 = vmatpush1.msra.mxu0 0.0
  %173 = vmatprep.subr.mxu0 0.0
  %174 = vmatpush1.msra.mxu0 0.0
  %175 = vmatprep.subr.mxu0 0.0
  %176 = vmatpush1.msra.mxu0 0.0
  %177 = vmatprep.subr.mxu0 0.0
  %178 = vmatpush1.msra.mxu0 0.0
  %179 = vmatprep.mubr.f32.mxu0 0.0
  %180 = vmatmul.mubr.f32.gmra.mrb[0].mxu0 %v110
  %v181 = vpop.f32.mrb[0].mxu0
  %v182 = vadd.f32 %v100, %v181
  %v183 = vpop.f32.mrb[0].mxu0
  %184 = vdwg.mxu0
  %v185 = vmax.f32 %v182, 0.0
  %v186 = vlaneseq
  %v187 = vshrl.u32 %v186, 7
  %v188 = vsub.s32 4, %v187
  %v189 = vrot.slane %v16, %v188
  %vm191 = vcmask 1041408
  %v192 = vrot.slane %v15, 6
  %v193 = vrot.slane %v16, 6
  %v194 = vsel %vm191, %v192, %v193
  %vm195 = vcmask 48128
  %v197 = vsel %vm195, %v185, 0
  %vm199 = vcmask 1045504
  %v200 = vsel %vm199, %v194, 0
  %202 = vmatprep.subr.mxu0 0.0
  %203 = vmatpush1.msra.mxu0 %v200
  %204 = vmatprep.subr.mxu0 0.0
  %205 = vmatpush1.msra.mxu0 0.0
  %206 = vmatprep.subr.mxu0 0.0
  %207 = vmatpush1.msra.mxu0 0.0
  %208 = vmatprep.subr.mxu0 0.0
  %209 = vmatpush1.msra.mxu0 0.0
  %210 = vmatprep.subr.mxu0 0.0
  %211 = vmatpush1.msra.mxu0 0.0
  %212 = vmatprep.subr.mxu0 0.0
  %213 = vmatpush1.msra.mxu0 0.0
  %214 = vmatprep.subr.mxu0 0.0
  %215 = vmatpush1.msra.mxu0 0.0
  %216 = vmatprep.subr.mxu0 0.0
  %217 = vmatpush1.msra.mxu0 0.0
  %218 = vmatprep.subr.mxu0 0.0
  %219 = vmatpush1.msra.mxu0 0.0
  %220 = vmatprep.subr.mxu0 0.0
  %221 = vmatpush1.msra.mxu0 0.0
  %222 = vmatprep.subr.mxu0 0.0
  %223 = vmatpush1.msra.mxu0 0.0
  %224 = vmatprep.subr.mxu0 0.0
  %225 = vmatpush1.msra.mxu0 0.0
  %226 = vmatprep.subr.mxu0 0.0
  %227 = vmatpush1.msra.mxu0 0.0
  %228 = vmatprep.subr.mxu0 0.0
  %229 = vmatpush1.msra.mxu0 0.0
  %230 = vmatprep.subr.mxu0 0.0
  %231 = vmatpush1.msra.mxu0 0.0
  %232 = vmatprep.subr.mxu0 0.0
  %233 = vmatpush1.msra.mxu0 0.0
  %234 = vmatprep.subr.mxu0 0.0
  %235 = vmatpush1.msra.mxu0 0.0
  %236 = vmatprep.subr.mxu0 0.0
  %237 = vmatpush1.msra.mxu0 0.0
  %238 = vmatprep.subr.mxu0 0.0
  %239 = vmatpush1.msra.mxu0 0.0
  %240 = vmatprep.subr.mxu0 0.0
  %241 = vmatpush1.msra.mxu0 0.0
  %242 = vmatprep.subr.mxu0 0.0
  %243 = vmatpush1.msra.mxu0 0.0
  %244 = vmatprep.subr.mxu0 0.0
  %245 = vmatpush1.msra.mxu0 0.0
  %246 = vmatprep.subr.mxu0 0.0
  %247 = vmatpush1.msra.mxu0 0.0
  %248 = vmatprep.subr.mxu0 0.0
  %249 = vmatpush1.msra.mxu0 0.0
  %250 = vmatprep.subr.mxu0 0.0
  %251 = vmatpush1.msra.mxu0 0.0
  %252 = vmatprep.subr.mxu0 0.0
  %253 = vmatpush1.msra.mxu0 0.0
  %254 = vmatprep.subr.mxu0 0.0
  %255 = vmatpush1.msra.mxu0 0.0
  %256 = vmatprep.subr.mxu0 0.0
  %257 = vmatpush1.msra.mxu0 0.0
  %258 = vmatprep.subr.mxu0 0.0
  %259 = vmatpush1.msra.mxu0 0.0
  %260 = vmatprep.subr.mxu0 0.0
  %261 = vmatpush1.msra.mxu0 0.0
  %262 = vmatprep.subr.mxu0 0.0
  %263 = vmatpush1.msra.mxu0 0.0
  %264 = vmatprep.subr.mxu0 0.0
  %265 = vmatpush1.msra.mxu0 0.0
  %266 = vmatprep.mubr.f32.mxu0 0.0
  %267 = vmatmul.mubr.f32.gmra.mrb[0].mxu0 %v197
  %v268 = vpop.f32.mrb[0].mxu0
  %v269 = vadd.f32 %v189, %v268
  %v270 = vpop.f32.mrb[0].mxu0
  %271 = vdwg.mxu0
  %vm272 = vcmask 15360
  %v273 = vsel %vm272, %v269, -inf
  %274 = vmax.xlane.f32.xlu0 %v273
  %v275 = vpop.xlane.xlu0 %274
  %v276 = vsub.f32 %v269, %v275
  %v277 = vmul.f32 %v276, 1.442695
  %v278 = vpow.pop %v277
  %v279 = vsel %vm272, %v278, 0.0
  %280 = vadd.xlane.f32.xlu0 %v279
  %v281 = vpop.xlane.xlu0 %280
  %v282 = vrcp.pop %v281
  %v283 = vmul.f32 %v278, %v282
  %284 = vst.msk [vmem:[%s2] sm:$0xff] %vm272, %v283
  // Predicated region
  $region10: #{simple_feed_forward.1} parent=0 // pred_check
    _
  $region11: #{simple_feed_forward.1} parent=0 // pred_check_branch
    %286 = sbr.rel (0) target = $region13
  $region12: #{simple_feed_forward.1} parent=0 // pred_region
    _
  $region13: #{simple_feed_forward.1} parent=0 // pred_fallthru
    _
  // Predicated region
  $region14: #{simple_feed_forward.1} parent=0 // pred_check
    _
  $region15: #{simple_feed_forward.1} parent=0 // pred_check_branch
    %288 = sbr.rel (0) target = $region17
  $region16: #{simple_feed_forward.1} parent=0 // pred_region
    _
  $region17: #{simple_feed_forward.1} parent=0 // pred_fallthru
    _

</llo_original>
